<compile_context>
chip_gen: v7x
topology: tpu7x:2x2x1
jax: 0.10.0
libtpu: 0.0.40
codegen_flags: <defaults>
</compile_context>

<pallas_src>
import functools

import jax
import jax.numpy as jnp
from jax.experimental import pallas as pl
from jax.experimental.pallas import tpu as pltpu


def _vmem_capacity_bytes():
    """Physical VMEM of the attached TPU generation (conservative fallback)."""
    try:
        info = pltpu.get_tpu_info()
        cap = getattr(info, "vmem_capacity_bytes", None)
        if cap:
            return int(cap)
    except Exception:
        pass
    return 64 << 20  # v7x per-TensorCore VMEM; safe lower bound for v5e/v6e.


# --------------------------------------------------------------------------
# Path A: one batch element per grid step, full (1, c, hw) tile in VMEM.
# --------------------------------------------------------------------------
def _iln_fused_kernel(params_ref, x_ref, o_ref, *, eps, hw, c):
    # params_ref: (3, c, 1) = [rho; gamma; beta].  x_ref/o_ref: (1, c, hw).
    x = x_ref[...].astype(jnp.float32)
    params = params_ref[...].astype(jnp.float32)
    rho = params[0:1]
    gamma = params[1:2]
    beta = params[2:3]

    # Instance-norm per-channel stats (mean-shifted two-pass: numerically safe).
    in_mean = jnp.sum(x, axis=2, keepdims=True) * (1.0 / hw)        # (1, c, 1)
    d = x - in_mean
    m2_c = jnp.sum(d * d, axis=2, keepdims=True)                    # (1, c, 1)
    in_var = m2_c * (1.0 / (hw - 1))

    # Layer-norm stats from the per-channel partials (Chan combine, O(C)).
    ln_mean = jnp.sum(in_mean, axis=1, keepdims=True) * (1.0 / c)   # (1, 1, 1)
    dm = in_mean - ln_mean
    m2_ln = (jnp.sum(m2_c, axis=1, keepdims=True)
             + float(hw) * jnp.sum(dm * dm, axis=1, keepdims=True))
    ln_var = m2_ln * (1.0 / (c * hw - 1))

    inv_in = jax.lax.rsqrt(in_var + eps)
    inv_ln = jax.lax.rsqrt(ln_var + eps)
    one_m_rho = 1.0 - rho

    # Fuse normalize + rho-blend + gamma/beta into a single per-channel affine.
    a = (rho * inv_in + one_m_rho * inv_ln) * gamma
    b = beta - (rho * in_mean * inv_in + one_m_rho * ln_mean * inv_ln) * gamma
    o_ref[...] = (x * a + b).astype(o_ref.dtype)


# --------------------------------------------------------------------------
# Path B: HW split into chunks, two-phase grid (n, 2, nchunks).
#   phase 0: Chan-accumulate per-channel mean/M2 over HW chunks into scratch.
#   phase 1: compute fused coefficients once, apply x*A + B per chunk.
# Output index_map maps all phase-0 steps to chunk 0's block, so every output
# block is flushed exactly once and only after phase 1 has written it.
# --------------------------------------------------------------------------
def _iln_chunked_kernel(params_ref, x_ref, o_ref,
                        mean_s, m2_s, a_s, b_s, *, eps, hw, hw_chunk, c):
    p = pl.program_id(1)
    j = pl.program_id(2)

    @pl.when(p == 0)
    def _accumulate():
        x = x_ref[...].astype(jnp.float32)                          # (1, c, hwc)
        cmean = jnp.sum(x, axis=2, keepdims=True) * (1.0 / hw_chunk)
        d = x - cmean
        cm2 = jnp.sum(d * d, axis=2, keepdims=True)

        @pl.when(j == 0)
        def _init():
            mean_s[...] = cmean
            m2_s[...] = cm2

        @pl.when(j != 0)
        def _combine():
            # Chan parallel-variance combine of equal-size chunk partials.
            n_old = (j * hw_chunk).astype(jnp.float32)
            m = jnp.float32(hw_chunk)
            new_n = n_old + m
            delta = cmean - mean_s[...]
            mean_s[...] = mean_s[...] + delta * (m / new_n)
            m2_s[...] = m2_s[...] + cm2 + (delta * delta) * (n_old * m / new_n)

    @pl.when(jnp.logical_and(p == 1, j == 0))
    def _finalize_coeffs():
        in_mean = mean_s[...]
        m2_c = m2_s[...]
        in_var = m2_c * (1.0 / (hw - 1))

        ln_mean = jnp.sum(in_mean, axis=1, keepdims=True) * (1.0 / c)
        dm = in_mean - ln_mean
        m2_ln = (jnp.sum(m2_c, axis=1, keepdims=True)
                 + float(hw) * jnp.sum(dm * dm, axis=1, keepdims=True))
        ln_var = m2_ln * (1.0 / (c * hw - 1))

        inv_in = jax.lax.rsqrt(in_var + eps)
        inv_ln = jax.lax.rsqrt(ln_var + eps)

        params = params_ref[...].astype(jnp.float32)
        rho = params[0:1]
        gamma = params[1:2]
        beta = params[2:3]
        one_m_rho = 1.0 - rho

        a_s[...] = (rho * inv_in + one_m_rho * inv_ln) * gamma
        b_s[...] = beta - (rho * in_mean * inv_in
                           + one_m_rho * ln_mean * inv_ln) * gamma

    @pl.when(p == 1)
    def _apply():
        x = x_ref[...].astype(jnp.float32)
        o_ref[...] = (x * a_s[...] + b_s[...]).astype(o_ref.dtype)


def _pick_hw_chunk(hw, c, elt, budget_bytes):
    """Largest multiple of 128 that divides hw and fits the VMEM budget."""
    if hw % 128 != 0:
        return None
    per_elem = c * (4 * elt + 12)  # 2 in + 2 out bufs (elt) + ~3 f32 temps
    max_chunk = max(128, (budget_bytes - (2 << 20)) // max(per_elem, 1))
    ch = min((max_chunk // 128) * 128, (hw // 2 // 128) * 128)
    while ch >= 128:
        if hw % ch == 0:
            return ch
        ch -= 128
    return None


def iln_forward(x, rho, gamma, beta, eps=1e-5, force_hw_chunk=None):
    """x: (N, C, H, W); rho/gamma/beta: (1, C, 1, 1)."""
    n, c, h, w = x.shape
    hw = h * w
    elt = jnp.dtype(x.dtype).itemsize

    # Free views: no HBM copies, no padding.
    x3 = x.reshape(n, c, hw)
    params = jnp.concatenate(
        [rho.reshape(1, c, 1), gamma.reshape(1, c, 1), beta.reshape(1, c, 1)],
        axis=0)                                                       # (3, c, 1)

    cap = _vmem_capacity_bytes()
    budget = (cap * 3) // 4                    # leave headroom under physical
    full_ws = c * hw * (4 * elt + 12)          # bufs + f32 working copies

    hw_chunk = None
    if force_hw_chunk is not None:
        if hw % force_hw_chunk == 0 and force_hw_chunk % 128 == 0 \
                and hw // force_hw_chunk >= 2:
            hw_chunk = int(force_hw_chunk)
    elif full_ws + (2 << 20) > budget:
        hw_chunk = _pick_hw_chunk(hw, c, elt, budget)

    if hw_chunk is None:
        # ---------------- Path A: full per-batch tile ----------------
        kernel = functools.partial(_iln_fused_kernel, eps=eps, hw=hw, c=c)
        vmem_limit = int(min(budget, max(32 << 20, full_ws + (2 << 20))))
        cost = pl.CostEstimate(
            flops=int(8 * n * c * hw),
            transcendentals=int(n * (c + 1)),
            bytes_accessed=int(2 * n * c * hw * elt + 3 * c * 4),
        )
        out3 = pl.pallas_call(
            kernel,
            out_shape=jax.ShapeDtypeStruct((n, c, hw), x.dtype),
            grid_spec=pltpu.PrefetchScalarGridSpec(
                num_scalar_prefetch=0,
                grid=(n,),
                in_specs=[
                    pl.BlockSpec((3, c, 1), lambda i: (0, 0, 0)),
                    pl.BlockSpec((1, c, hw), lambda i: (i, 0, 0)),
                ],
                out_specs=pl.BlockSpec((1, c, hw), lambda i: (i, 0, 0)),
            ),
            compiler_params=pltpu.CompilerParams(
                dimension_semantics=("parallel",),
                vmem_limit_bytes=vmem_limit,
            ),
            cost_estimate=cost,
        )(params, x3)
    else:
        # ---------------- Path B: HW-chunked two-phase ----------------
        nchunks = hw // hw_chunk
        kernel = functools.partial(
            _iln_chunked_kernel, eps=eps, hw=hw, hw_chunk=hw_chunk, c=c)
        chunk_ws = c * hw_chunk * (4 * elt + 12)
        vmem_limit = int(min(budget, max(32 << 20, chunk_ws + (2 << 20))))
        cost = pl.CostEstimate(
            flops=int(9 * n * c * hw),
            transcendentals=int(n * (c + 1)),
            bytes_accessed=int(3 * n * c * hw * elt + 3 * c * 4),
        )
        out3 = pl.pallas_call(
            kernel,
            out_shape=jax.ShapeDtypeStruct((n, c, hw), x.dtype),
            grid_spec=pltpu.PrefetchScalarGridSpec(
                num_scalar_prefetch=0,
                grid=(n, 2, nchunks),
                in_specs=[
                    pl.BlockSpec((3, c, 1), lambda i, p, j: (0, 0, 0)),
                    pl.BlockSpec((1, c, hw_chunk), lambda i, p, j: (i, 0, j)),
                ],
                # Phase 0 steps all point at chunk 0's block, so each output
                # block is flushed exactly once, after phase 1 has written it.
                out_specs=pl.BlockSpec((1, c, hw_chunk),
                                       lambda i, p, j: (i, 0, j * p)),
                scratch_shapes=[
                    pltpu.VMEM((1, c, 1), jnp.float32),  # running mean
                    pltpu.VMEM((1, c, 1), jnp.float32),  # running M2
                    pltpu.VMEM((1, c, 1), jnp.float32),  # fused scale A
                    pltpu.VMEM((1, c, 1), jnp.float32),  # fused bias  B
                ],
            ),
            compiler_params=pltpu.CompilerParams(
                dimension_semantics=("parallel", "arbitrary", "arbitrary"),
                vmem_limit_bytes=vmem_limit,
            ),
            cost_estimate=cost,
        )(params, x3)

    return out3.reshape(n, c, h, w)


def _iln_reference(x, rho, gamma, beta, eps=1e-5):
    # Pure-JAX reference matching torch semantics (unbiased variance).
    in_mean = jnp.mean(x, axis=(2, 3), keepdims=True)
    in_var = jnp.var(x, axis=(2, 3), keepdims=True, ddof=1)
    out_in = (x - in_mean) / jnp.sqrt(in_var + eps)
    ln_mean = jnp.mean(x, axis=(1, 2, 3), keepdims=True)
    ln_var = jnp.var(x, axis=(1, 2, 3), keepdims=True, ddof=1)
    out_ln = (x - ln_mean) / jnp.sqrt(ln_var + eps)
    out = rho * out_in + (1.0 - rho) * out_ln
    return out * gamma + beta


if __name__ == "__main__":
    key = jax.random.PRNGKey(0)
    N, C, H, W = 2, 4, 16, 16
    kx, kr, kg, kb = jax.random.split(key, 4)
    x = jax.random.normal(kx, (N, C, H, W), dtype=jnp.float32)

    # Case 1: default ILN init (rho=0, gamma=1, beta=0) — fused single-tile path.
    rho0 = jnp.zeros((1, C, 1, 1), dtype=jnp.float32)
    gamma0 = jnp.ones((1, C, 1, 1), dtype=jnp.float32)
    beta0 = jnp.zeros((1, C, 1, 1), dtype=jnp.float32)
    out0 = jax.block_until_ready(iln_forward(x, rho0, gamma0, beta0))
    ref0 = _iln_reference(x, rho0, gamma0, beta0)
    assert jnp.allclose(out0, ref0, atol=1e-4, rtol=1e-4), "mismatch (default init)"

    # Case 2: non-trivial parameters exercising both IN and LN paths.
    rho1 = jax.random.uniform(kr, (1, C, 1, 1), dtype=jnp.float32)
    gamma1 = 1.0 + 0.1 * jax.random.normal(kg, (1, C, 1, 1), dtype=jnp.float32)
    beta1 = 0.1 * jax.random.normal(kb, (1, C, 1, 1), dtype=jnp.float32)
    out1 = jax.block_until_ready(iln_forward(x, rho1, gamma1, beta1))
    ref1 = _iln_reference(x, rho1, gamma1, beta1)
    assert jnp.allclose(out1, ref1, atol=1e-4, rtol=1e-4), "mismatch (random params)"

    # Case 3: force the HW-chunked two-phase path (used for large C*H*W / v7x)
    # on the same small problem to validate it end-to-end.
    out2 = jax.block_until_ready(
        iln_forward(x, rho1, gamma1, beta1, force_hw_chunk=128))
    assert jnp.allclose(out2, ref1, atol=1e-4, rtol=1e-4), "mismatch (chunked path)"

    print("KERNEL_OK")
</pallas_src>

<mosaic_0001>
module attributes {stable_mosaic.version = 11 : i64} {
  func.func @_iln_fused_kernel(%arg0: i32, %arg1: memref<3x4x1xf32, #tpu.memory_space<vmem>>, %arg2: memref<1x4x256xf32, #tpu.memory_space<vmem>>, %arg3: memref<1x4x256xf32, #tpu.memory_space<vmem>>) attributes {dimension_semantics = [#tpu.dimension_semantics<parallel>], iteration_bounds = array<i64: 2>, scalar_prefetch = 0 : i64, scratch_operands = 0 : i64, tpu.core_type = #tpu.core_type<tc>, window_params = [{pipeline_mode = #tpu.pipeline_mode<synchronous>, transform_indices = @transform_0, window_bounds = array<i64: 3, 4, 1>}, {transform_indices = @transform_1, window_bounds = array<i64: 1, 4, 256>}, {transform_indices = @transform_2, window_bounds = array<i64: 1, 4, 256>}]} {
    %c0 = arith.constant 0 : index
    %c0_0 = arith.constant 0 : index
    %c0_1 = arith.constant 0 : index
    %0 = vector.load %arg2[%c0, %c0_0, %c0_1] : memref<1x4x256xf32, #tpu.memory_space<vmem>>, vector<1x4x256xf32>
    %c0_2 = arith.constant 0 : index
    %c0_3 = arith.constant 0 : index
    %c0_4 = arith.constant 0 : index
    %1 = vector.load %arg1[%c0_2, %c0_3, %c0_4] : memref<3x4x1xf32, #tpu.memory_space<vmem>>, vector<3x4x1xf32>
    %2 = vector.extract_strided_slice %1 {offsets = [0, 0, 0], sizes = [1, 4, 1], strides = [1, 1, 1]} : vector<3x4x1xf32> to vector<1x4x1xf32>
    %3 = vector.extract_strided_slice %1 {offsets = [1, 0, 0], sizes = [1, 4, 1], strides = [1, 1, 1]} : vector<3x4x1xf32> to vector<1x4x1xf32>
    %4 = vector.extract_strided_slice %1 {offsets = [2, 0, 0], sizes = [1, 4, 1], strides = [1, 1, 1]} : vector<3x4x1xf32> to vector<1x4x1xf32>
    %cst = arith.constant dense<0.000000e+00> : vector<1x4xf32>
    %5 = vector.multi_reduction <add>, %0, %cst [2] : vector<1x4x256xf32> to vector<1x4xf32>
    %6 = vector.shape_cast %5 : vector<1x4xf32> to vector<1x4x1xf32>
    %cst_5 = arith.constant 3.906250e-03 : f32
    %7 = vector.broadcast %cst_5 : f32 to vector<1x4x1xf32>
    %8 = arith.mulf %6, %7 : vector<1x4x1xf32>
    %9 = vector.broadcast %8 : vector<1x4x1xf32> to vector<1x4x256xf32>
    %10 = arith.subf %0, %9 : vector<1x4x256xf32>
    %11 = arith.mulf %10, %10 : vector<1x4x256xf32>
    %cst_6 = arith.constant dense<0.000000e+00> : vector<1x4xf32>
    %12 = vector.multi_reduction <add>, %11, %cst_6 [2] : vector<1x4x256xf32> to vector<1x4xf32>
    %13 = vector.shape_cast %12 : vector<1x4xf32> to vector<1x4x1xf32>
    %cst_7 = arith.constant 0.00392156886 : f32
    %14 = vector.broadcast %cst_7 : f32 to vector<1x4x1xf32>
    %15 = arith.mulf %13, %14 : vector<1x4x1xf32>
    %cst_8 = arith.constant dense<0.000000e+00> : vector<1x1xf32>
    %16 = vector.multi_reduction <add>, %8, %cst_8 [1] : vector<1x4x1xf32> to vector<1x1xf32>
    %17 = vector.shape_cast %16 : vector<1x1xf32> to vector<1x1x1xf32>
    %cst_9 = arith.constant 2.500000e-01 : f32
    %18 = vector.broadcast %cst_9 : f32 to vector<1x1x1xf32>
    %19 = arith.mulf %17, %18 : vector<1x1x1xf32>
    %20 = vector.broadcast %19 : vector<1x1x1xf32> to vector<1x4x1xf32>
    %21 = arith.subf %8, %20 : vector<1x4x1xf32>
    %cst_10 = arith.constant dense<0.000000e+00> : vector<1x1xf32>
    %22 = vector.multi_reduction <add>, %13, %cst_10 [1] : vector<1x4x1xf32> to vector<1x1xf32>
    %23 = vector.shape_cast %22 : vector<1x1xf32> to vector<1x1x1xf32>
    %24 = arith.mulf %21, %21 : vector<1x4x1xf32>
    %cst_11 = arith.constant dense<0.000000e+00> : vector<1x1xf32>
    %25 = vector.multi_reduction <add>, %24, %cst_11 [1] : vector<1x4x1xf32> to vector<1x1xf32>
    %26 = vector.shape_cast %25 : vector<1x1xf32> to vector<1x1x1xf32>
    %cst_12 = arith.constant 2.560000e+02 : f32
    %27 = vector.broadcast %cst_12 : f32 to vector<1x1x1xf32>
    %28 = arith.mulf %27, %26 : vector<1x1x1xf32>
    %29 = arith.addf %23, %28 : vector<1x1x1xf32>
    %cst_13 = arith.constant 9.77517105E-4 : f32
    %30 = vector.broadcast %cst_13 : f32 to vector<1x1x1xf32>
    %31 = arith.mulf %29, %30 : vector<1x1x1xf32>
    %cst_14 = arith.constant 9.99999974E-6 : f32
    %32 = vector.broadcast %cst_14 : f32 to vector<1x4x1xf32>
    %33 = arith.addf %15, %32 : vector<1x4x1xf32>
    %34 = math.rsqrt %33 : vector<1x4x1xf32>
    %cst_15 = arith.constant 9.99999974E-6 : f32
    %35 = vector.broadcast %cst_15 : f32 to vector<1x1x1xf32>
    %36 = arith.addf %31, %35 : vector<1x1x1xf32>
    %37 = math.rsqrt %36 : vector<1x1x1xf32>
    %cst_16 = arith.constant 1.000000e+00 : f32
    %38 = vector.broadcast %cst_16 : f32 to vector<1x4x1xf32>
    %39 = arith.subf %38, %2 : vector<1x4x1xf32>
    %40 = arith.mulf %2, %34 : vector<1x4x1xf32>
    %41 = vector.broadcast %37 : vector<1x1x1xf32> to vector<1x4x1xf32>
    %42 = arith.mulf %39, %41 : vector<1x4x1xf32>
    %43 = arith.addf %40, %42 : vector<1x4x1xf32>
    %44 = arith.mulf %43, %3 : vector<1x4x1xf32>
    %45 = arith.mulf %2, %8 : vector<1x4x1xf32>
    %46 = arith.mulf %45, %34 : vector<1x4x1xf32>
    %47 = vector.broadcast %19 : vector<1x1x1xf32> to vector<1x4x1xf32>
    %48 = arith.mulf %39, %47 : vector<1x4x1xf32>
    %49 = vector.broadcast %37 : vector<1x1x1xf32> to vector<1x4x1xf32>
    %50 = arith.mulf %48, %49 : vector<1x4x1xf32>
    %51 = arith.addf %46, %50 : vector<1x4x1xf32>
    %52 = arith.mulf %51, %3 : vector<1x4x1xf32>
    %53 = arith.subf %4, %52 : vector<1x4x1xf32>
    %54 = vector.broadcast %44 : vector<1x4x1xf32> to vector<1x4x256xf32>
    %55 = arith.mulf %0, %54 : vector<1x4x256xf32>
    %56 = vector.broadcast %53 : vector<1x4x1xf32> to vector<1x4x256xf32>
    %57 = arith.addf %55, %56 : vector<1x4x256xf32>
    %c0_17 = arith.constant 0 : index
    %c0_18 = arith.constant 0 : index
    %c0_19 = arith.constant 0 : index
    %58 = vector.load %arg3[%c0_17, %c0_18, %c0_19] : memref<1x4x256xf32, #tpu.memory_space<vmem>>, vector<1x4x256xf32>
    tpu.vector_store %arg3[%c0_17, %c0_18, %c0_19], %57 {strides = array<i32>} : memref<1x4x256xf32, #tpu.memory_space<vmem>>, vector<1x4x256xf32>,
    return
  }
  func.func @transform_0(%arg0: i32) -> (i32, i32, i32) {
    %c0_i32 = arith.constant 0 : i32
    %c0_i32_0 = arith.constant 0 : i32
    %c0_i32_1 = arith.constant 0 : i32
    %c0_i32_2 = arith.constant 0 : i32
    return %c0_i32, %c0_i32_0, %c0_i32_1 : i32, i32, i32
  }
  func.func @transform_1(%arg0: i32) -> (i32, i32, i32) {
    %c0_i32 = arith.constant 0 : i32
    %c0_i32_0 = arith.constant 0 : i32
    %c0_i32_1 = arith.constant 0 : i32
    return %arg0, %c0_i32, %c0_i32_0 : i32, i32, i32
  }
  func.func @transform_2(%arg0: i32) -> (i32, i32, i32) {
    %c0_i32 = arith.constant 0 : i32
    %c0_i32_0 = arith.constant 0 : i32
    %c0_i32_1 = arith.constant 0 : i32
    return %arg0, %c0_i32, %c0_i32_0 : i32, i32, i32
  }
}

</mosaic_0001>

<llo_original>
// kernel: tpu_custom_call.1
$region0: #{tpu_custom_call.1}
  #allocation0 [shape = 'u32[]', space=smem, size = 0x4, offset = 0x4, fixed_abs, tag = 'smem constant byte address 0x4 - core index']
  #allocation1 [shape = 'u32[144,128]{1,0:T(1,128)}', space=vmem, size = 0x12000, scoped, tag = 'internal scratch']
  %s0 = inlined_call_operand.vmem [shape: f32[3,4,1], index: 0, kind: input, shape index: {}]
  %s1 = inlined_call_operand.vmem [shape: f32[2,4,256], index: 1, kind: input, shape index: {}]
  %s2 = inlined_call_operand.hbm [shape: f32[2,4,256], index: 2, kind: output, shape index: {}]
  %s3 = sld [smem:[#allocation0]]
  $region41: #{tpu_custom_call.1} parent=0
    _
  %s5 = ssub.s32 1, %s3
  %s6 = scalar_select 0, %s5, %s3
  $region1: #{tpu_custom_call.1} parent=0
    #allocation2 [shape = 'u8[8192]{0}', space=vmem, size = 0x2000, scoped, tag = 'output window, operand 0']
    #allocation3 [shape = 's32[2]{0}', space=sflag, size = 0x8, scoped, tag = 'scoped memory for tpu_custom_call.1']
    %7 = vsyncpa [#allocation3], 0
    %s8 = scalar_lea.sflag [#allocation3], 1
    %9 = vsyncpa %s8, 0
    loop: start=0, step=1, limit=4
    $region2: #{tpu_custom_call.1} parent=1 // loop_pre_header
      _
    $region3: #{tpu_custom_call.1} parent=1 // loop_header
      %s11 = sphi 0, %s15
      %p12 = scmp.ge.s32.totalorder %s11, 4
      %s19 = sphi 0, %s19
      %s21 = sphi 0, %s19
      %s22 = sphi 0, %s21
      %s36 = sphi 0, %s22
      %s42 = sphi 0, %s44
      %s45 = sphi 0, %s42
      %s46 = sphi 0, %s45
      %s62 = sphi 0, %s46
      %s68 = sphi 0, %s70
      %s71 = sphi 0, %s68
      %s72 = sphi 0, %s71
      %s88 = sphi 0, %s72
    $region4: #{tpu_custom_call.1} parent=1 // loop_header_branch
      %14 = sbr.rel (%p12) target = $region8
    $region5: #{tpu_custom_call.1} parent=1 // loop_body
      %s16 = ssub.s32 %s11, 1
      %s17 = ssub.s32 %s11, 2
      %s18 = sadd.s32 %s11, 1
      %s20 = sadd.s32 %s19, 1
      %p23 = scmp.eq.s32.totalorder %s11, 1
      %p24 = scmp.ne.s32.totalorder %s19, %s21
      %p25 = scmp.eq.s32.totalorder %s11, 0
      %p26 = por %p24, %p25
      %p27 = scmp.ne.s32.totalorder %s19, %s21
      %p28 = scmp.eq.s32.totalorder %s16, 1
      %p29 = por %p27, %p28
      %p30 = scmp.ne.s32.totalorder %s21, %s22
      %p31 = scmp.eq.s32.totalorder %s16, 0
      %p32 = por %p30, %p31
      %p33 = scmp.ne.s32.totalorder %s21, %s22
      %p34 = scmp.eq.s32.totalorder %s17, 1
      %p35 = por %p33, %p34
      %p37 = scmp.ne.s32.totalorder %s22, %s36
      %p38 = scmp.eq.s32.totalorder %s17, 0
      %p39 = por %p37, %p38
      %s40 = ssub.s32 %s11, %s18
      %p41 = scmp.eq.s32.totalorder %s40, 0
      %s43 = sadd.s32 %s42, 1
      %s44 = scalar_select %p41, %s42, %s43
      %p47 = pneg %p41
      %p48 = scmp.eq.s32.totalorder %s11, 1
      %p49 = por %p47, %p48
      %p50 = scmp.ne.s32.totalorder %s42, %s45
      %p51 = scmp.eq.s32.totalorder %s11, 0
      %p52 = por %p50, %p51
      %p53 = scmp.ne.s32.totalorder %s42, %s45
      %p54 = scmp.eq.s32.totalorder %s16, 1
      %p55 = por %p53, %p54
      %p56 = scmp.ne.s32.totalorder %s45, %s46
      %p57 = scmp.eq.s32.totalorder %s16, 0
      %p58 = por %p56, %p57
      %p59 = scmp.ne.s32.totalorder %s45, %s46
      %p60 = scmp.eq.s32.totalorder %s17, 1
      %p61 = por %p59, %p60
      %p63 = scmp.ne.s32.totalorder %s46, %s62
      %p64 = scmp.eq.s32.totalorder %s17, 0
      %p65 = por %p63, %p64
      %s66 = ssub.s32 %s11, %s18
      %p67 = scmp.eq.s32.totalorder %s66, 0
      %s69 = sadd.s32 %s68, 1
      %s70 = scalar_select %p67, %s68, %s69
      %p73 = pneg %p67
      %p74 = scmp.eq.s32.totalorder %s11, 1
      %p75 = por %p73, %p74
      %p76 = scmp.ne.s32.totalorder %s68, %s71
      %p77 = scmp.eq.s32.totalorder %s11, 0
      %p78 = por %p76, %p77
      %p79 = scmp.ne.s32.totalorder %s68, %s71
      %p80 = scmp.eq.s32.totalorder %s16, 1
      %p81 = por %p79, %p80
      %p82 = scmp.ne.s32.totalorder %s71, %s72
      %p83 = scmp.eq.s32.totalorder %s16, 0
      %p84 = por %p82, %p83
      %p85 = scmp.ne.s32.totalorder %s71, %s72
      %p86 = scmp.eq.s32.totalorder %s17, 1
      %p87 = por %p85, %p86
      %p89 = scmp.ne.s32.totalorder %s72, %s88
      %p90 = scmp.eq.s32.totalorder %s17, 0
      %p91 = por %p89, %p90
      %p92 = scmp.le.s32.totalorder 1, %s11
      %p93 = scmp.lt.s32.totalorder %s11, 3
      %p94 = pnand %p92, %p93
      %p95 = pneg %p94
      // Predicated region
      $region9: #{tpu_custom_call.1} parent=5 // pred_check
        _
      $region10: #{tpu_custom_call.1} parent=5 // pred_check_branch
        %97 = sbr.rel (%p94) target = $region12
      $region11: #{tpu_custom_call.1} parent=5 // pred_region
        %s98 = ssub.s32 %s11, 1
        // Predicated region
        $region13: #{tpu_custom_call.1} parent=11 // pred_check
          %p99 = pneg %p32
        $region14: #{tpu_custom_call.1} parent=11 // pred_check_branch
          %101 = sbr.rel (%p99) target = $region16
        $region15: #{tpu_custom_call.1} parent=11 // pred_region
          _
        $region16: #{tpu_custom_call.1} parent=11 // pred_fallthru
          _
      $region12: #{tpu_custom_call.1} parent=5 // pred_fallthru
        _
      %p102 = scmp.lt.s32.totalorder %s11, 2
      // Predicated region
      $region17: #{tpu_custom_call.1} parent=5 // pred_check
        %p103 = pneg %p102
      $region18: #{tpu_custom_call.1} parent=5 // pred_check_branch
        %105 = sbr.rel (%p103) target = $region20
      $region19: #{tpu_custom_call.1} parent=5 // pred_region
        // Predicated region
        $region21: #{tpu_custom_call.1} parent=19 // pred_check
          %p106 = pneg %p52
        $region22: #{tpu_custom_call.1} parent=19 // pred_check_branch
          %108 = sbr.rel (%p106) target = $region24
        $region23: #{tpu_custom_call.1} parent=19 // pred_region
          %p109 = scmp.lt.s32.totalorder %s11, 1
          %s110 = scalar_select %p109, %s11, 1
          %s111 = smul.addr %s110, 2
          %s112 = smul.addr %s111, 4
          %s113 = scalar_lea.vmem %s1, %s112
        $region24: #{tpu_custom_call.1} parent=19 // pred_fallthru
          _
      $region20: #{tpu_custom_call.1} parent=5 // pred_fallthru
        _
      %p114 = scmp.le.s32.totalorder 1, %s11
      %p115 = scmp.lt.s32.totalorder %s11, 3
      %p116 = pnand %p114, %p115
      %p117 = pneg %p116
      // Predicated region
      $region25: #{tpu_custom_call.1} parent=5 // pred_check
        _
      $region26: #{tpu_custom_call.1} parent=5 // pred_check_branch
        %119 = sbr.rel (%p116) target = $region28
      $region27: #{tpu_custom_call.1} parent=5 // pred_region
        %s120 = ssub.s32 %s11, 1
        %p121 = pneg %p32
        %p122 = pneg %p29
        %p123 = scmp.lt.s32.totalorder %s16, 1
        %s124 = scalar_select %p123, %s16, 1
        %s125 = smul.addr %s124, 2
        %s126 = smul.addr %s125, 4
        %s127 = scalar_lea.vmem %s1, %s126
        %p128 = pneg %p58
        %p129 = pneg %p55
        %p130 = pneg %p84
        %p131 = pneg %p81
        %s132 = sand.u32 %s71, 1
        %s133 = scalar_lea.sflag [#allocation3], %s132
        %s134 = sand.u32 %s71, 1
        %s135 = smul.addr %s134, 8
        %s136 = scalar_lea.vmem [#allocation2], %s135
        %p137 = scmp.lt.s32.totalorder %s16, 1
        %s138 = scalar_select %p137, %s16, 1
        %s139 = smul.addr %s138, 2
        %s140 = smul.addr %s139, 4
        %s141 = scalar_lea.vmem %s1, %s140
        %v142 = vld [vmem:[%s141] sm:$0xff]
        %v143 = vld [vmem:[%s0] sm:$0xf]
        %v144 = vld [vmem:[%s0 + $0x4] sm:$0xf]
        %v145 = vld [vmem:[%s0 + $0x8] sm:$0xf]
        %v147 = vcombine.high %v142, %v142
        %vm149 = vcmask 1043456
        %v150 = vsel %vm149, %v142, 0.0
        %v151 = vsel %vm149, %v147, 0.0
        %v152 = vadd.f32 %v150, %v151
        %153 = vadd.xlane.f32.xlu0 %v152
        %v154 = vpop.xlane.xlu0 %153
        %v155 = vmul.f32 %v154, 0.00390625
        %v158 = vunpack.c.l.s4 839922192
        %v159 = vunpack.c.0.s8 %v158
        %v160 = vlaneseq
        %v161 = vshrl.u32 %v160, 7
        %v162 = vsub.s32 %v159, %v161
        %v163 = vrot.slane %v155, %v162
        %v165 = vsub.f32 %v142, %v163
        %v166 = vmul.f32 %v165, %v165
        %v168 = vcombine.high %v166, %v166
        %v170 = vsel %vm149, %v166, 0.0
        %v171 = vsel %vm149, %v168, 0.0
        %v172 = vadd.f32 %v170, %v171
        %173 = vadd.xlane.f32.xlu0 %v172
        %v174 = vpop.xlane.xlu0 %173
        %v175 = vmul.f32 %v174, 0.003921569
        %v176 = vsel %vm149, %v155, 0.0
        %v177 = vrot.slane %v176, 4
        %v178 = vadd.f32 %v176, %v177
        %v179 = vrot.slane %v178, 2
        %v180 = vadd.f32 %v178, %v179
        %v181 = vrot.slane %v180, 1
        %v182 = vadd.f32 %v180, %v181
        %v183 = vmul.f32 %v182, 0.25
        %v184 = vsub.f32 %v155, %v183
        %v185 = vsel %vm149, %v174, 0.0
        %v186 = vrot.slane %v185, 4
        %v187 = vadd.f32 %v185, %v186
        %v188 = vrot.slane %v187, 2
        %v189 = vadd.f32 %v187, %v188
        %v190 = vrot.slane %v189, 1
        %v191 = vadd.f32 %v189, %v190
        %v192 = vmul.f32 %v184, %v184
        %v193 = vsel %vm149, %v192, 0.0
        %v194 = vrot.slane %v193, 4
        %v195 = vadd.f32 %v193, %v194
        %v196 = vrot.slane %v195, 2
        %v197 = vadd.f32 %v195, %v196
        %v198 = vrot.slane %v197, 1
        %v199 = vadd.f32 %v197, %v198
        %v200 = vmul.f32 %v199, 256.0
        %v201 = vadd.f32 %v191, %v200
        %v202 = vmul.f32 %v201, 0.0009775171
        %v203 = vadd.f32 %v175, 1e-05
        %v204 = vrsqrt.pop %v203
        %v205 = vadd.f32 %v202, 1e-05
        %v206 = vrsqrt.pop %v205
        %v207 = vsub.f32 1.0, %v143
        %v208 = vmul.f32 %v143, %v204
        %v209 = vmul.f32 %v207, %v206
        %v210 = vadd.f32 %v208, %v209
        %v211 = vmul.f32 %v210, %v144
        %v212 = vmul.f32 %v143, %v155
        %v213 = vmul.f32 %v212, %v204
        %v214 = vmul.f32 %v207, %v183
        %v215 = vmul.f32 %v214, %v206
        %v216 = vadd.f32 %v213, %v215
        %v217 = vmul.f32 %v216, %v144
        %v218 = vsub.f32 %v145, %v217
        %220 = vset.pattern.permute.xlu0 0
        %221 = vperm.xlu0 %220, %v211
        %v222 = vpop.permute.xlu0 %221
        %v224 = vunpack.c.l.s4 839922192
        %v225 = vunpack.c.0.s8 %v224
        %v226 = vlaneseq
        %v227 = vshrl.u32 %v226, 7
        %v228 = vsub.s32 %v225, %v227
        %v229 = vrot.slane %v222, %v228
        %v231 = vmul.f32 %v142, %v229
        %233 = vset.pattern.permute.xlu0 0
        %234 = vperm.xlu0 %233, %v218
        %v235 = vpop.permute.xlu0 %234
        %v237 = vunpack.c.l.s4 839922192
        %v238 = vunpack.c.0.s8 %v237
        %v239 = vlaneseq
        %v240 = vshrl.u32 %v239, 7
        %v241 = vsub.s32 %v238, %v240
        %v242 = vrot.slane %v235, %v241
        %v244 = vadd.f32 %v231, %v242
        %245 = vst [vmem:[%s136] sm:$0xff] %v244
        %s246 = sand.u32 %s71, 1
        %s247 = scalar_lea.sflag [#allocation3], %s246
        %s248 = sand.u32 %s71, 1
        %s249 = smul.addr %s248, 8
        %s250 = scalar_lea.vmem [#allocation2], %s249
        // Predicated region
        $region29: #{tpu_custom_call.1} parent=27 // pred_check
          %p251 = pneg %p81
        $region30: #{tpu_custom_call.1} parent=27 // pred_check_branch
          %253 = sbr.rel (%p251) target = $region32
        $region31: #{tpu_custom_call.1} parent=27 // pred_region
          %s255 = ssub.s32 128, 128
          %256 = vsyncadd %s247, %s255
          %s257 = smul.addr %s16, 2
          %s258 = smul.addr %s257, 64
          %s259 = scalar_lea.hbm %s2, %s258
          %s261 = sshll.u32 %s250, 4
          %s262 = int_to_ptr.vmem [resolvable:$true] %s261
          %264 = dma.vmem_to_hbm [thread:$0]  %s262, 128, %s259, %s247
        $region32: #{tpu_custom_call.1} parent=27 // pred_fallthru
          _
      $region28: #{tpu_custom_call.1} parent=5 // pred_fallthru
        _
      %p265 = scmp.le.s32.totalorder 2, %s11
      // Predicated region
      $region33: #{tpu_custom_call.1} parent=5 // pred_check
        %p266 = pneg %p265
      $region34: #{tpu_custom_call.1} parent=5 // pred_check_branch
        %268 = sbr.rel (%p266) target = $region36
      $region35: #{tpu_custom_call.1} parent=5 // pred_region
        %s269 = ssub.s32 %s11, 2
        // Predicated region
        $region37: #{tpu_custom_call.1} parent=35 // pred_check
          %p270 = pneg %p87
        $region38: #{tpu_custom_call.1} parent=35 // pred_check_branch
          %272 = sbr.rel (%p270) target = $region40
        $region39: #{tpu_custom_call.1} parent=35 // pred_region
          %s273 = sand.u32 %s72, 1
          %s274 = scalar_lea.sflag [#allocation3], %s273
          %s275 = sand.u32 %s72, 1
          %s276 = smul.addr %s275, 8
          %s277 = scalar_lea.vmem [#allocation2], %s276
          %278 = dma.done %s274, 128
        $region40: #{tpu_custom_call.1} parent=35 // pred_fallthru
          _
      $region36: #{tpu_custom_call.1} parent=5 // pred_fallthru
        _
    $region6: #{tpu_custom_call.1} parent=1 // loop_footer
      %s15 = sadd.s32 1, %s11
    $region7: #{tpu_custom_call.1} parent=1 // loop_footer_branch
      %10 = sbr.rel target = $region3
    $region8: #{tpu_custom_call.1} parent=1 // loop_exit
      _
    %279 = vsyncpa [#allocation3], 1
    %s280 = scalar_lea.sflag [#allocation3], 1
    %281 = vsyncpa %s280, 1

</llo_original>
